<compile_context>
chip_gen: v5e
topology: v5e:2x2
jax: 0.10.0
libtpu: 0.0.40
codegen_flags: <defaults>
</compile_context>

<pallas_src>
from functools import partial
from math import cos, pi, sqrt

import jax
import jax.numpy as jnp
from jax.experimental import pallas as pl
from jax.experimental.pallas import tpu as pltpu


# ---------------------------------------------------------------------------
# Parameter construction (plain JAX glue; replicates DCTLayer.get_dct_filter)
# ---------------------------------------------------------------------------
def build_dct_filter(length_feature: int, mapper_x, channel: int) -> jnp.ndarray:
    """Returns the (channel, length) DCT filter buffer."""
    assert channel % len(mapper_x) == 0
    c_part = channel // len(mapper_x)
    rows = []
    for u_x in mapper_x:
        row = []
        for t_x in range(length_feature):
            r = cos(pi * u_x * (t_x + 0.5) / length_feature) / sqrt(length_feature)
            if u_x != 0:
                r = r * sqrt(2.0)
            row.append(r)
        rows.append(jnp.asarray(row, dtype=jnp.float32))
    # each selected frequency fills a contiguous block of c_part channels
    filt = jnp.concatenate(
        [jnp.broadcast_to(r[None, :], (c_part, length_feature)) for r in rows], axis=0
    )
    return filt  # (channel, length)


# ---------------------------------------------------------------------------
# Pallas kernel: DCT pooling -> FC bottleneck (ReLU, Sigmoid) -> channel gate
# ---------------------------------------------------------------------------
def _msdct_kernel(x_ref, dctw_ref, w1t_ref, w2t_ref, o_ref, *, channels_last, mxu_dtype):
    dct_w = dctw_ref[...]  # f32, (C, L) or (L, C)

    # 1) DCT pooling in f32. The f32 product is consumed immediately by the
    #    reduction; no (TB, C, L)-sized f32 value is kept live past this point.
    if channels_last:
        # x tile: (TB, L, C) -> pool over L (sublane axis)
        y = jnp.sum(x_ref[...].astype(jnp.float32) * dct_w[None, :, :], axis=1)   # (TB, C)
    else:
        # x tile: (TB, C, L) -> pool over L (lane axis)
        y = jnp.sum(x_ref[...].astype(jnp.float32) * dct_w[None, :, :], axis=-1)  # (TB, C)

    # 2) SE bottleneck: bf16 MXU operands (single-pass vmatmul), f32 accumulation.
    h = jnp.dot(y.astype(mxu_dtype), w1t_ref[...], preferred_element_type=jnp.float32)
    h = jnp.maximum(h, 0.0)
    z = jnp.dot(h.astype(mxu_dtype), w2t_ref[...], preferred_element_type=jnp.float32)
    z = jax.nn.sigmoid(z)                      # (TB, C) f32

    # 3) Channel gate. Re-read x in its I/O dtype so no f32 copy of the whole
    #    tile had to survive the matmuls (bf16 x -> bf16 gate on v6e/v7x VPU;
    #    v5e's compiler upcasts automatically).
    zc = z.astype(o_ref.dtype)
    if channels_last:
        o_ref[...] = (x_ref[...] * zc[:, None, :]).astype(o_ref.dtype)
    else:
        o_ref[...] = (x_ref[...] * zc[:, :, None]).astype(o_ref.dtype)


# ---------------------------------------------------------------------------
# VMEM sizing (generation-aware) and batch-tile selection
# ---------------------------------------------------------------------------
_FALLBACK_VMEM_CAP = 64 * 1024 * 1024  # conservative (v7x per-TC physical VMEM)


def _vmem_limit_bytes() -> int:
    cap = _FALLBACK_VMEM_CAP
    try:
        info = pltpu.get_tpu_info()
        cap = int(getattr(info, "vmem_capacity_bytes", cap)) or cap
    except Exception:
        pass
    # ~112 MiB on 128 MiB parts (v5e/v6e), ~48 MiB on 64 MiB parts (v7x).
    limit = min(cap * 7 // 8, cap - (16 << 20))
    return max(limit, 16 << 20)


def _choose_batch_tile(B: int, C: int, L: int, io_itemsize: int, tile_budget: int) -> int:
    # Per batch row: double-buffered input tile + double-buffered output tile,
    # both in the I/O dtype. The f32 pooling transient is fused into the
    # reduction and covered by the limit-vs-budget headroom.
    row_bytes = C * L * 4 * io_itemsize
    if tile_budget <= 0 or row_bytes > tile_budget:
        # TODO(synk): implement a two-pass reduce-then-gate kernel tiled over L
        # for (C, L) slabs that do not fit VMEM even at TB=1.
        raise ValueError(
            f"single-row slab (C={C}, L={L}) needs {row_bytes} B of VMEM "
            f"(> tile budget {tile_budget} B); an L-tiled two-pass kernel is required"
        )
    tb = max(1, min(B, tile_budget // row_bytes))
    if B >= 2:
        # Keep at least 2 grid steps so the "parallel" batch axis can be
        # sharded across the two TensorCores of a v7x chip.
        tb = min(tb, pl.cdiv(B, 2))
    if tb >= 8:
        tb = (tb // 8) * 8  # sublane-align the MXU M dimension
    return tb


# ---------------------------------------------------------------------------
# Wrapper: pallas_call
# ---------------------------------------------------------------------------
def multispectral_dct_layer(x, dct_w, w1, w2, *, channels_last: bool = False,
                            mxu_dtype=jnp.bfloat16):
    """
    channels_last=False: x is (B, C, L) -- PyTorch layout (fallback; lane-masked
                         stores when L < 128).
    channels_last=True:  x is (B, L, C) -- lane-dense layout, preferred when the
                         producer already emits NLC and C >= 128. Do not pay an
                         XLA transpose just to reach this path.

    dct_w: (C, L)      DCT filter buffer.
    w1:    (C_red, C)  first Linear weight  (PyTorch out x in, no bias).
    w2:    (C, C_red)  second Linear weight (no bias).
    """
    if channels_last:
        B, L, C = x.shape
    else:
        B, C, L = x.shape
    C_red = w1.shape[0]

    # One-time layout / dtype plumbing (tiny, stays in XLA).
    dct_w = dct_w.astype(jnp.float32)
    if channels_last:
        dct_w = dct_w.T                          # (L, C)
    w1t = w1.astype(mxu_dtype).T                 # (C, C_red)
    w2t = w2.astype(mxu_dtype).T                 # (C_red, C)

    io_itemsize = jnp.dtype(x.dtype).itemsize
    vmem_limit = _vmem_limit_bytes()
    weight_bytes = 2 * (dct_w.size * 4
                        + (w1t.size + w2t.size) * jnp.dtype(mxu_dtype).itemsize)
    tile_budget = vmem_limit - weight_bytes - (8 << 20)   # 8 MiB compiler headroom
    TB = _choose_batch_tile(B, C, L, io_itemsize, tile_budget)
    grid = (pl.cdiv(B, TB),)   # ragged last block: OOB reads don't-care, writes dropped

    x_block = (TB, L, C) if channels_last else (TB, C, L)

    cost = pl.CostEstimate(
        flops=3 * B * C * L + 4 * B * C * C_red,
        transcendentals=B * C,
        bytes_accessed=2 * B * C * L * io_itemsize + weight_bytes // 2,
    )

    kernel = partial(_msdct_kernel, channels_last=channels_last, mxu_dtype=mxu_dtype)

    return pl.pallas_call(
        kernel,
        out_shape=jax.ShapeDtypeStruct(x.shape, x.dtype),
        grid_spec=pltpu.PrefetchScalarGridSpec(
            num_scalar_prefetch=0,
            grid=grid,
            in_specs=[
                pl.BlockSpec(x_block, lambda b: (b, 0, 0)),
                # Weights: full-array blocks, constant index_map -> DMA'd once,
                # resident across all batch tiles.
                pl.BlockSpec(dct_w.shape, lambda b: (0, 0)),
                pl.BlockSpec(w1t.shape, lambda b: (0, 0)),
                pl.BlockSpec(w2t.shape, lambda b: (0, 0)),
            ],
            out_specs=pl.BlockSpec(x_block, lambda b: (b, 0, 0)),
        ),
        compiler_params=pltpu.CompilerParams(
            dimension_semantics=("parallel",),   # megacore sharding on v7x
            vmem_limit_bytes=vmem_limit,
        ),
        cost_estimate=cost,
    )(x, dct_w, w1t, w2t)


# ---------------------------------------------------------------------------
# Pure-JAX references (for sanity checking)
# ---------------------------------------------------------------------------
def reference(x, dct_w, w1, w2, mxu_dtype=jnp.float32):
    y = jnp.sum(x.astype(jnp.float32) * dct_w[None, :, :], axis=-1)            # (B, C)
    h = jnp.maximum(
        jnp.dot(y.astype(mxu_dtype), w1.T.astype(mxu_dtype),
                preferred_element_type=jnp.float32), 0.0)
    z = jax.nn.sigmoid(
        jnp.dot(h.astype(mxu_dtype), w2.T.astype(mxu_dtype),
                preferred_element_type=jnp.float32))
    return x * z[:, :, None].astype(x.dtype)


if __name__ == "__main__":
    # Small, module-consistent shapes:
    #   channel=32, length_feature=64, reduction=16, freq_sel_method=[0]
    B, C, L = 2, 32, 64
    reduction = 16
    freq_sel_method = [0]
    C_red = max(1, C // reduction)

    # mapper_x scaling from MultiSpectralDCTLayer.__init__
    mapper_x = [f * (L // 64) for f in freq_sel_method]
    dct_w = build_dct_filter(L, mapper_x, C)            # (C, L) buffer

    key = jax.random.PRNGKey(0)
    k_x, k_w1, k_w2, k_x2 = jax.random.split(key, 4)
    x = jax.random.normal(k_x, (B, C, L), dtype=jnp.float32)
    # Deterministic synthetic Linear weights (PyTorch layout: out x in).
    w1 = jax.random.normal(k_w1, (C_red, C), dtype=jnp.float32) * (1.0 / sqrt(C))
    w2 = jax.random.normal(k_w2, (C, C_red), dtype=jnp.float32) * (1.0 / sqrt(C_red))

    ref_f32 = reference(x, dct_w, w1, w2, mxu_dtype=jnp.float32)
    ref_bf16 = reference(x, dct_w, w1, w2, mxu_dtype=jnp.bfloat16)

    # 1) PyTorch-layout path (B, C, L).
    out = jax.block_until_ready(multispectral_dct_layer(x, dct_w, w1, w2))
    assert out.shape == (B, C, L)
    assert jnp.allclose(out, ref_bf16, atol=1e-2, rtol=1e-2), "NCL mismatch (matched precision)"
    assert jnp.allclose(out, ref_f32, atol=5e-2, rtol=5e-2), "NCL mismatch vs f32 reference"

    # 2) Lane-dense (B, L, C) path (preferred in production when C >= 128 > L).
    #    The transpose here is test plumbing only.
    x_nlc = jnp.transpose(x, (0, 2, 1))
    out_nlc = jax.block_until_ready(
        multispectral_dct_layer(x_nlc, dct_w, w1, w2, channels_last=True)
    )
    assert jnp.allclose(jnp.transpose(out_nlc, (0, 2, 1)), ref_bf16,
                        atol=1e-2, rtol=1e-2), "NLC mismatch (matched precision)"

    # 3) Ragged-grid path: B=5 forces cdiv(B, TB) with a partial last block.
    B2 = 5
    x2 = jax.random.normal(k_x2, (B2, C, L), dtype=jnp.float32)
    out2 = jax.block_until_ready(multispectral_dct_layer(x2, dct_w, w1, w2))
    ref2 = reference(x2, dct_w, w1, w2, mxu_dtype=jnp.bfloat16)
    assert jnp.allclose(out2, ref2, atol=1e-2, rtol=1e-2), "ragged-grid mismatch"

    print("KERNEL_OK")
</pallas_src>

<mosaic_0001>
module attributes {stable_mosaic.version = 11 : i64} {
  func.func @_msdct_kernel(%arg0: i32, %arg1: memref<1x32x64xf32, #tpu.memory_space<vmem>>, %arg2: memref<32x64xf32, #tpu.memory_space<vmem>>, %arg3: memref<32x2xbf16, #tpu.memory_space<vmem>>, %arg4: memref<2x32xbf16, #tpu.memory_space<vmem>>, %arg5: memref<1x32x64xf32, #tpu.memory_space<vmem>>) attributes {dimension_semantics = [#tpu.dimension_semantics<parallel>], iteration_bounds = array<i64: 2>, scalar_prefetch = 0 : i64, scratch_operands = 0 : i64, tpu.core_type = #tpu.core_type<tc>, window_params = [{transform_indices = @transform_0, window_bounds = array<i64: 1, 32, 64>}, {pipeline_mode = #tpu.pipeline_mode<synchronous>, transform_indices = @transform_1, window_bounds = array<i64: 32, 64>}, {pipeline_mode = #tpu.pipeline_mode<synchronous>, transform_indices = @transform_2, window_bounds = array<i64: 32, 2>}, {pipeline_mode = #tpu.pipeline_mode<synchronous>, transform_indices = @transform_3, window_bounds = array<i64: 2, 32>}, {transform_indices = @transform_4, window_bounds = array<i64: 1, 32, 64>}]} {
    %c0 = arith.constant 0 : index
    %c0_0 = arith.constant 0 : index
    %0 = vector.load %arg2[%c0, %c0_0] : memref<32x64xf32, #tpu.memory_space<vmem>>, vector<32x64xf32>
    %c0_1 = arith.constant 0 : index
    %c0_2 = arith.constant 0 : index
    %c0_3 = arith.constant 0 : index
    %1 = vector.load %arg1[%c0_1, %c0_2, %c0_3] : memref<1x32x64xf32, #tpu.memory_space<vmem>>, vector<1x32x64xf32>
    %2 = vector.shape_cast %0 : vector<32x64xf32> to vector<1x32x64xf32>
    %3 = arith.mulf %1, %2 : vector<1x32x64xf32>
    %cst = arith.constant dense<0.000000e+00> : vector<1x32xf32>
    %4 = vector.multi_reduction <add>, %3, %cst [2] : vector<1x32x64xf32> to vector<1x32xf32>
    %5 = arith.truncf %4 : vector<1x32xf32> to vector<1x32xbf16>
    %c0_4 = arith.constant 0 : index
    %c0_5 = arith.constant 0 : index
    %6 = vector.load %arg3[%c0_4, %c0_5] : memref<32x2xbf16, #tpu.memory_space<vmem>>, vector<32x2xbf16>
    %cst_6 = arith.constant dense<0.000000e+00> : vector<1x2xf32>
    %7 = tpu.matmul %5, %6, %cst_6 {dimension_numbers = #tpu.dot_dimension_numbers<[1], [0], [0], [1], [0, 0, 1, 1], [], []>} : vector<1x32xbf16>, vector<32x2xbf16>, vector<1x2xf32> -> vector<1x2xf32>
    %cst_7 = arith.constant 0.000000e+00 : f32
    %8 = vector.broadcast %cst_7 : f32 to vector<1x2xf32>
    %9 = arith.maximumf %7, %8 : vector<1x2xf32>
    %10 = arith.truncf %9 : vector<1x2xf32> to vector<1x2xbf16>
    %c0_8 = arith.constant 0 : index
    %c0_9 = arith.constant 0 : index
    %11 = vector.load %arg4[%c0_8, %c0_9] : memref<2x32xbf16, #tpu.memory_space<vmem>>, vector<2x32xbf16>
    %cst_10 = arith.constant dense<0.000000e+00> : vector<1x32xf32>
    %12 = tpu.matmul %10, %11, %cst_10 {dimension_numbers = #tpu.dot_dimension_numbers<[1], [0], [0], [1], [0, 0, 1, 1], [], []>} : vector<1x2xbf16>, vector<2x32xbf16>, vector<1x32xf32> -> vector<1x32xf32>
    %13 = arith.negf %12 : vector<1x32xf32>
    %14 = math.exp %13 : vector<1x32xf32>
    %cst_11 = arith.constant 1.000000e+00 : f32
    %15 = vector.broadcast %cst_11 : f32 to vector<1x32xf32>
    %16 = arith.addf %15, %14 : vector<1x32xf32>
    %17 = arith.divf %15, %16 : vector<1x32xf32>
    %c0_12 = arith.constant 0 : index
    %c0_13 = arith.constant 0 : index
    %c0_14 = arith.constant 0 : index
    %18 = vector.load %arg1[%c0_12, %c0_13, %c0_14] : memref<1x32x64xf32, #tpu.memory_space<vmem>>, vector<1x32x64xf32>
    %19 = vector.shape_cast %17 : vector<1x32xf32> to vector<1x32x1xf32>
    %20 = vector.broadcast %19 : vector<1x32x1xf32> to vector<1x32x64xf32>
    %21 = arith.mulf %18, %20 : vector<1x32x64xf32>
    %c0_15 = arith.constant 0 : index
    %c0_16 = arith.constant 0 : index
    %c0_17 = arith.constant 0 : index
    %22 = vector.load %arg5[%c0_15, %c0_16, %c0_17] : memref<1x32x64xf32, #tpu.memory_space<vmem>>, vector<1x32x64xf32>
    tpu.vector_store %arg5[%c0_15, %c0_16, %c0_17], %21 {strides = array<i32>} : memref<1x32x64xf32, #tpu.memory_space<vmem>>, vector<1x32x64xf32>,
    return
  }
  func.func @transform_0(%arg0: i32) -> (i32, i32, i32) {
    %c0_i32 = arith.constant 0 : i32
    %c0_i32_0 = arith.constant 0 : i32
    %c0_i32_1 = arith.constant 0 : i32
    return %arg0, %c0_i32, %c0_i32_0 : i32, i32, i32
  }
  func.func @transform_1(%arg0: i32) -> (i32, i32) {
    %c0_i32 = arith.constant 0 : i32
    %c0_i32_0 = arith.constant 0 : i32
    %c0_i32_1 = arith.constant 0 : i32
    return %c0_i32, %c0_i32_0 : i32, i32
  }
  func.func @transform_2(%arg0: i32) -> (i32, i32) {
    %c0_i32 = arith.constant 0 : i32
    %c0_i32_0 = arith.constant 0 : i32
    %c0_i32_1 = arith.constant 0 : i32
    return %c0_i32, %c0_i32_0 : i32, i32
  }
  func.func @transform_3(%arg0: i32) -> (i32, i32) {
    %c0_i32 = arith.constant 0 : i32
    %c0_i32_0 = arith.constant 0 : i32
    %c0_i32_1 = arith.constant 0 : i32
    return %c0_i32, %c0_i32_0 : i32, i32
  }
  func.func @transform_4(%arg0: i32) -> (i32, i32, i32) {
    %c0_i32 = arith.constant 0 : i32
    %c0_i32_0 = arith.constant 0 : i32
    %c0_i32_1 = arith.constant 0 : i32
    return %arg0, %c0_i32, %c0_i32_0 : i32, i32, i32
  }
}

</mosaic_0001>

<llo_original>
// kernel: tpu_custom_call.1
$region0: #{tpu_custom_call.1}
  #allocation0 [shape = 'u32[]', space=smem, size = 0x4, offset = 0x4, fixed_abs, tag = 'smem constant byte address 0x4 - core index']
  #allocation1 [shape = 'u32[72,128]{1,0:T(1,128)}', space=vmem, size = 0x9000, scoped, tag = 'internal scratch']
  %s0 = inlined_call_operand.hbm [shape: f32[2,32,64], index: 0, kind: input, shape index: {}]
  %s1 = inlined_call_operand.hbm [shape: f32[32,64], index: 1, kind: input, shape index: {}]
  %s2 = inlined_call_operand.vmem [shape: bf16[32,2], index: 2, kind: input, shape index: {}]
  %s3 = inlined_call_operand.vmem [shape: bf16[2,32], index: 3, kind: input, shape index: {}]
  %s4 = inlined_call_operand.hbm [shape: f32[2,32,64], index: 4, kind: output, shape index: {}]
  %s5 = sld [smem:[#allocation0]]
  $region57: #{tpu_custom_call.1} parent=0
    _
  %s7 = ssub.s32 1, %s5
  %s8 = scalar_select 0, %s7, %s5
  $region1: #{tpu_custom_call.1} parent=0
    #allocation2 [shape = 'u8[32768]{0}', space=vmem, size = 0x8000, scoped, tag = 'input window, operand 0']
    #allocation3 [shape = 's32[2]{0}', space=sflag, size = 0x8, scoped, tag = 'scoped memory for tpu_custom_call.1']
    #allocation4 [shape = 's32[2]{0}', space=sflag, size = 0x8, scoped, tag = 'scoped memory for tpu_custom_call.1']
    #allocation5 [shape = 'u8[16384]{0}', space=vmem, size = 0x4000, scoped, tag = 'input window, operand 1, single buffered']
    #allocation6 [shape = 's32[1]{0}', space=sflag, size = 0x4, scoped, tag = 'scoped memory for tpu_custom_call.1']
    #allocation7 [shape = 'u8[32768]{0}', space=vmem, size = 0x8000, scoped, tag = 'output window, operand 0']
    %9 = vsyncpa [#allocation3], 0
    %s10 = scalar_lea.sflag [#allocation3], 1
    %11 = vsyncpa %s10, 0
    %12 = vsyncpa [#allocation6], 0
    %13 = vsyncpa [#allocation4], 0
    %s14 = scalar_lea.sflag [#allocation4], 1
    %15 = vsyncpa %s14, 0
    loop: start=0, step=1, limit=4
    $region2: #{tpu_custom_call.1} parent=1 // loop_pre_header
      _
    $region3: #{tpu_custom_call.1} parent=1 // loop_header
      %s17 = sphi 0, %s21
      %p18 = scmp.ge.s32.totalorder %s17, 4
      %s27 = sphi 0, %s29
      %s30 = sphi 0, %s27
      %s31 = sphi 0, %s30
      %s47 = sphi 0, %s31
      %s51 = sphi 0, %s51
      %s53 = sphi 0, %s51
      %s54 = sphi 0, %s53
      %s68 = sphi 0, %s54
      %s72 = sphi 0, %s72
      %s74 = sphi 0, %s72
      %s75 = sphi 0, %s74
      %s89 = sphi 0, %s75
      %s93 = sphi 0, %s93
      %s95 = sphi 0, %s93
      %s96 = sphi 0, %s95
      %s110 = sphi 0, %s96
      %s116 = sphi 0, %s118
      %s119 = sphi 0, %s116
      %s120 = sphi 0, %s119
      %s136 = sphi 0, %s120
    $region4: #{tpu_custom_call.1} parent=1 // loop_header_branch
      %20 = sbr.rel (%p18) target = $region8
    $region5: #{tpu_custom_call.1} parent=1 // loop_body
      %s22 = ssub.s32 %s17, 1
      %s23 = ssub.s32 %s17, 2
      %s24 = sadd.s32 %s17, 1
      %s25 = ssub.s32 %s17, %s24
      %p26 = scmp.eq.s32.totalorder %s25, 0
      %s28 = sadd.s32 %s27, 1
      %s29 = scalar_select %p26, %s27, %s28
      %p32 = pneg %p26
      %p33 = scmp.eq.s32.totalorder %s17, 1
      %p34 = por %p32, %p33
      %p35 = scmp.ne.s32.totalorder %s27, %s30
      %p36 = scmp.eq.s32.totalorder %s17, 0
      %p37 = por %p35, %p36
      %p38 = scmp.ne.s32.totalorder %s27, %s30
      %p39 = scmp.eq.s32.totalorder %s22, 1
      %p40 = por %p38, %p39
      %p41 = scmp.ne.s32.totalorder %s30, %s31
      %p42 = scmp.eq.s32.totalorder %s22, 0
      %p43 = por %p41, %p42
      %p44 = scmp.ne.s32.totalorder %s30, %s31
      %p45 = scmp.eq.s32.totalorder %s23, 1
      %p46 = por %p44, %p45
      %p48 = scmp.ne.s32.totalorder %s31, %s47
      %p49 = scmp.eq.s32.totalorder %s23, 0
      %p50 = por %p48, %p49
      %s52 = sadd.s32 %s51, 1
      %p55 = scmp.eq.s32.totalorder %s17, 1
      %p56 = scmp.ne.s32.totalorder %s51, %s53
      %p57 = scmp.eq.s32.totalorder %s17, 0
      %p58 = por %p56, %p57
      %p59 = scmp.ne.s32.totalorder %s51, %s53
      %p60 = scmp.eq.s32.totalorder %s22, 1
      %p61 = por %p59, %p60
      %p62 = scmp.ne.s32.totalorder %s53, %s54
      %p63 = scmp.eq.s32.totalorder %s22, 0
      %p64 = por %p62, %p63
      %p65 = scmp.ne.s32.totalorder %s53, %s54
      %p66 = scmp.eq.s32.totalorder %s23, 1
      %p67 = por %p65, %p66
      %p69 = scmp.ne.s32.totalorder %s54, %s68
      %p70 = scmp.eq.s32.totalorder %s23, 0
      %p71 = por %p69, %p70
      %s73 = sadd.s32 %s72, 1
      %p76 = scmp.eq.s32.totalorder %s17, 1
      %p77 = scmp.ne.s32.totalorder %s72, %s74
      %p78 = scmp.eq.s32.totalorder %s17, 0
      %p79 = por %p77, %p78
      %p80 = scmp.ne.s32.totalorder %s72, %s74
      %p81 = scmp.eq.s32.totalorder %s22, 1
      %p82 = por %p80, %p81
      %p83 = scmp.ne.s32.totalorder %s74, %s75
      %p84 = scmp.eq.s32.totalorder %s22, 0
      %p85 = por %p83, %p84
      %p86 = scmp.ne.s32.totalorder %s74, %s75
      %p87 = scmp.eq.s32.totalorder %s23, 1
      %p88 = por %p86, %p87
      %p90 = scmp.ne.s32.totalorder %s75, %s89
      %p91 = scmp.eq.s32.totalorder %s23, 0
      %p92 = por %p90, %p91
      %s94 = sadd.s32 %s93, 1
      %p97 = scmp.eq.s32.totalorder %s17, 1
      %p98 = scmp.ne.s32.totalorder %s93, %s95
      %p99 = scmp.eq.s32.totalorder %s17, 0
      %p100 = por %p98, %p99
      %p101 = scmp.ne.s32.totalorder %s93, %s95
      %p102 = scmp.eq.s32.totalorder %s22, 1
      %p103 = por %p101, %p102
      %p104 = scmp.ne.s32.totalorder %s95, %s96
      %p105 = scmp.eq.s32.totalorder %s22, 0
      %p106 = por %p104, %p105
      %p107 = scmp.ne.s32.totalorder %s95, %s96
      %p108 = scmp.eq.s32.totalorder %s23, 1
      %p109 = por %p107, %p108
      %p111 = scmp.ne.s32.totalorder %s96, %s110
      %p112 = scmp.eq.s32.totalorder %s23, 0
      %p113 = por %p111, %p112
      %s114 = ssub.s32 %s17, %s24
      %p115 = scmp.eq.s32.totalorder %s114, 0
      %s117 = sadd.s32 %s116, 1
      %s118 = scalar_select %p115, %s116, %s117
      %p121 = pneg %p115
      %p122 = scmp.eq.s32.totalorder %s17, 1
      %p123 = por %p121, %p122
      %p124 = scmp.ne.s32.totalorder %s116, %s119
      %p125 = scmp.eq.s32.totalorder %s17, 0
      %p126 = por %p124, %p125
      %p127 = scmp.ne.s32.totalorder %s116, %s119
      %p128 = scmp.eq.s32.totalorder %s22, 1
      %p129 = por %p127, %p128
      %p130 = scmp.ne.s32.totalorder %s119, %s120
      %p131 = scmp.eq.s32.totalorder %s22, 0
      %p132 = por %p130, %p131
      %p133 = scmp.ne.s32.totalorder %s119, %s120
      %p134 = scmp.eq.s32.totalorder %s23, 1
      %p135 = por %p133, %p134
      %p137 = scmp.ne.s32.totalorder %s120, %s136
      %p138 = scmp.eq.s32.totalorder %s23, 0
      %p139 = por %p137, %p138
      %p140 = scmp.le.s32.totalorder 1, %s17
      %p141 = scmp.lt.s32.totalorder %s17, 3
      %p142 = pnand %p140, %p141
      %p143 = pneg %p142
      // Predicated region
      $region9: #{tpu_custom_call.1} parent=5 // pred_check
        _
      $region10: #{tpu_custom_call.1} parent=5 // pred_check_branch
        %145 = sbr.rel (%p142) target = $region12
      $region11: #{tpu_custom_call.1} parent=5 // pred_region
        %s146 = ssub.s32 %s17, 1
        // Predicated region
        $region13: #{tpu_custom_call.1} parent=11 // pred_check
          %p147 = pneg %p64
        $region14: #{tpu_custom_call.1} parent=11 // pred_check_branch
          %149 = sbr.rel (%p147) target = $region16
        $region15: #{tpu_custom_call.1} parent=11 // pred_region
          %151 = vsyncadd [#allocation6], 0
          %s152 = sshll.u32 %s1, 4
          %s153 = int_to_ptr.hbm [resolvable:$true] %s152
          %s154 = sshll.u32 [#allocation5], 4
          %s155 = int_to_ptr.vmem [resolvable:$true] %s154
          %160 = dma.hbm_to_vmem [thread:$0]  %s153, 512, %s155, [#allocation6], 128, 128, 8
        $region16: #{tpu_custom_call.1} parent=11 // pred_fallthru
          _
        // Predicated region
        $region17: #{tpu_custom_call.1} parent=11 // pred_check
          %p161 = pneg %p85
        $region18: #{tpu_custom_call.1} parent=11 // pred_check_branch
          %163 = sbr.rel (%p161) target = $region20
        $region19: #{tpu_custom_call.1} parent=11 // pred_region
          _
        $region20: #{tpu_custom_call.1} parent=11 // pred_fallthru
          _
        // Predicated region
        $region21: #{tpu_custom_call.1} parent=11 // pred_check
          %p164 = pneg %p106
        $region22: #{tpu_custom_call.1} parent=11 // pred_check_branch
          %166 = sbr.rel (%p164) target = $region24
        $region23: #{tpu_custom_call.1} parent=11 // pred_region
          _
        $region24: #{tpu_custom_call.1} parent=11 // pred_fallthru
          _
      $region12: #{tpu_custom_call.1} parent=5 // pred_fallthru
        _
      %p167 = scmp.lt.s32.totalorder %s17, 2
      // Predicated region
      $region25: #{tpu_custom_call.1} parent=5 // pred_check
        %p168 = pneg %p167
      $region26: #{tpu_custom_call.1} parent=5 // pred_check_branch
        %170 = sbr.rel (%p168) target = $region28
      $region27: #{tpu_custom_call.1} parent=5 // pred_region
        // Predicated region
        $region29: #{tpu_custom_call.1} parent=27 // pred_check
          %p171 = pneg %p37
        $region30: #{tpu_custom_call.1} parent=27 // pred_check_branch
          %173 = sbr.rel (%p171) target = $region32
        $region31: #{tpu_custom_call.1} parent=27 // pred_region
          %s174 = sand.u32 %s27, 1
          %s175 = scalar_lea.sflag [#allocation3], %s174
          %s176 = sand.u32 %s27, 1
          %s177 = smul.addr %s176, 32
          %s178 = scalar_lea.vmem [#allocation2], %s177
          %180 = vsyncadd %s175, 0
          %s181 = smul.addr %s17, 4
          %s182 = smul.addr %s181, 8
          %s183 = scalar_lea.hbm %s0, %s182
          %s184 = sshll.u32 %s183, 4
          %s185 = int_to_ptr.hbm [resolvable:$true] %s184
          %s186 = sshll.u32 %s178, 4
          %s187 = int_to_ptr.vmem [resolvable:$true] %s186
          %192 = dma.hbm_to_vmem [thread:$0]  %s185, 512, %s187, %s175, 128, 128, 8
        $region32: #{tpu_custom_call.1} parent=27 // pred_fallthru
          _
      $region28: #{tpu_custom_call.1} parent=5 // pred_fallthru
        _
      %p193 = scmp.le.s32.totalorder 1, %s17
      %p194 = scmp.lt.s32.totalorder %s17, 3
      %p195 = pnand %p193, %p194
      %p196 = pneg %p195
      // Predicated region
      $region33: #{tpu_custom_call.1} parent=5 // pred_check
        _
      $region34: #{tpu_custom_call.1} parent=5 // pred_check_branch
        %198 = sbr.rel (%p195) target = $region36
      $region35: #{tpu_custom_call.1} parent=5 // pred_region
        %s199 = ssub.s32 %s17, 1
        %s200 = sand.u32 %s30, 1
        %s201 = scalar_lea.sflag [#allocation3], %s200
        %s202 = sand.u32 %s30, 1
        %s203 = smul.addr %s202, 32
        %s204 = scalar_lea.vmem [#allocation2], %s203
        // Predicated region
        $region37: #{tpu_custom_call.1} parent=35 // pred_check
          %p205 = pneg %p43
        $region38: #{tpu_custom_call.1} parent=35 // pred_check_branch
          %207 = sbr.rel (%p205) target = $region40
        $region39: #{tpu_custom_call.1} parent=35 // pred_region
          %209 = dma.done %s201, 512
        $region40: #{tpu_custom_call.1} parent=35 // pred_fallthru
          _
        // Predicated region
        $region41: #{tpu_custom_call.1} parent=35 // pred_check
          %p210 = pneg %p64
        $region42: #{tpu_custom_call.1} parent=35 // pred_check_branch
          %212 = sbr.rel (%p210) target = $region44
        $region43: #{tpu_custom_call.1} parent=35 // pred_region
          %214 = dma.done [#allocation6], 512
        $region44: #{tpu_custom_call.1} parent=35 // pred_fallthru
          _
        %s215 = sand.u32 %s30, 1
        %s216 = scalar_lea.sflag [#allocation3], %s215
        %s217 = sand.u32 %s30, 1
        %s218 = smul.addr %s217, 32
        %s219 = scalar_lea.vmem [#allocation2], %s218
        %p220 = pneg %p43
        %p221 = pneg %p40
        %p222 = pneg %p64
        %p223 = pneg %p61
        %p224 = pneg %p85
        %p225 = pneg %p82
        %p226 = pneg %p106
        %p227 = pneg %p103
        %p228 = pneg %p132
        %p229 = pneg %p129
        %s230 = sand.u32 %s119, 1
        %s231 = scalar_lea.sflag [#allocation4], %s230
        %s232 = sand.u32 %s119, 1
        %s233 = smul.addr %s232, 32
        %s234 = scalar_lea.vmem [#allocation7], %s233
        %v236 = vld [vmem:[#allocation5] sm:$0xff]
        %v237 = vld [vmem:[#allocation5 + $0x8] sm:$0xff]
        %v238 = vld [vmem:[#allocation5 + $0x10] sm:$0xff]
        %v239 = vld [vmem:[#allocation5 + $0x18] sm:$0xff]
        %v240 = vld [vmem:[%s204] sm:$0xff]
        %v241 = vld [vmem:[%s204 + $0x8] sm:$0xff]
        %v242 = vld [vmem:[%s204 + $0x10] sm:$0xff]
        %v243 = vld [vmem:[%s204 + $0x18] sm:$0xff]
        %v244 = vmul.f32 %v240, %v236
        %v245 = vmul.f32 %v241, %v237
        %v246 = vmul.f32 %v242, %v238
        %v247 = vmul.f32 %v243, %v239
        %vm248 = vcmask 523264
        %v249 = vsel %vm248, %v244, 0.0
        %250 = vadd.xlane.f32.xlu0 %v249
        %v251 = vpop.xlane.xlu0 %250
        %v252 = vsel %vm248, %v245, 0.0
        %253 = vadd.xlane.f32.xlu0 %v252
        %v254 = vpop.xlane.xlu0 %253
        %v255 = vsel %vm248, %v246, 0.0
        %256 = vadd.xlane.f32.xlu0 %v255
        %v257 = vpop.xlane.xlu0 %256
        %v258 = vsel %vm248, %v247, 0.0
        %259 = vadd.xlane.f32.xlu0 %v258
        %v260 = vpop.xlane.xlu0 %259
        %v261 = vpack.c.bf16 %v254, %v251
        %v262 = vpack.c.bf16 %v260, %v257
        %v263 = vld [vmem:[%s2] sm:$0xf]
        %v264 = vld [vmem:[%s2 + $0x4] sm:$0xf]
        %v265 = vld [vmem:[%s2 + $0x8] sm:$0xf]
        %v266 = vld [vmem:[%s2 + $0xc] sm:$0xf]
        %v269 = vunpack.c.l.b16 %v261
        %v270 = vunpack.c.h.b16 %v261
        %v271 = vunpack.c.l.b16 %v262
        %v272 = vunpack.c.h.b16 %v262
        %v273 = vlaneseq
        %v274 = vand.u32 %v273, 127
        %v275 = vperm.slane %v269, %v274
        %v276 = vadd.s32 %v274, 4294967288
        %v277 = vperm.slane %v270, %v276
        %vm278 = vcmask 130112
        %v279 = vsel %vm278, %v277, %v275
        %v280 = vadd.s32 %v274, 4294967280
        %v281 = vperm.slane %v271, %v280
        %vm282 = vcmask 195712
        %v283 = vsel %vm282, %v281, %v279
        %v284 = vadd.s32 %v274, 4294967272
        %v285 = vperm.slane %v272, %v284
        %vm286 = vcmask 261312
        %v287 = vsel %vm286, %v285, %v283
        %v288 = vpack.c.b16 %v287, %v287
        %v293 = vunpack.c.l.b16 %v263
        %v294 = vunpack.c.l.b16 %v264
        %v295 = vunpack.c.l.b16 %v265
        %v296 = vunpack.c.l.b16 %v266
        %v297 = vpack.c.b16 %v294, %v293
        %v298 = vpack.c.b16 %v296, %v295
        %vm301 = vcmask 261120
        %v303 = vsel %vm301, %v288, 0
        %305 = vmatpush.bf16.msra.mxu0 0
        %306 = vmatpush.bf16.msra.mxu0 0
        %307 = vmatpush.bf16.msra.mxu0 0
        %308 = vmatpush.bf16.msra.mxu0 0
        %309 = vmatpush.bf16.msra.mxu0 0
        %310 = vmatpush.bf16.msra.mxu0 0
        %311 = vmatpush.bf16.msra.mxu0 %v298
        %312 = vmatpush.bf16.msra.mxu0 %v297
        %313 = vmatmul.bf16.gmra.mxu0 %v303
        %v314 = vpop.f32.mrf.mxu0
        %v315 = vadd.f32 0.0, %v314
        %v316 = vpop.f32.mrf.mxu0
        %317 = vdwg.mxu0
        %v318 = vmax.f32 %v315, 0.0
        %v319 = vpack.c.bf16 %v318, %v318
        %v320 = vld [vmem:[%s3] sm:$0x1]
        %vm321 = vcmask 15360
        %v323 = vsel %vm321, %v319, 0
        %vm325 = vcmask 1040384
        %v327 = vsel %vm325, %v320, 0
        %329 = vmatpush.bf16.msra.mxu0 0
        %330 = vmatpush.bf16.msra.mxu0 0
        %331 = vmatpush.bf16.msra.mxu0 0
        %332 = vmatpush.bf16.msra.mxu0 0
        %333 = vmatpush.bf16.msra.mxu0 0
        %334 = vmatpush.bf16.msra.mxu0 0
        %335 = vmatpush.bf16.msra.mxu0 0
        %336 = vmatpush.bf16.msra.mxu0 %v327
        %337 = vmatmul.bf16.gmra.mxu0 %v323
        %v338 = vpop.f32.mrf.mxu0
        %v339 = vadd.f32 0.0, %v338
        %v340 = vpop.f32.mrf.mxu0
        %341 = vdwg.mxu0
        %v342 = vxor.u32 %v339, 2147483648
        %v343 = vmul.f32 %v342, 1.442695
        %v344 = vpow.pop %v343
        %v345 = vadd.f32 %v344, 1.0
        %v346 = vrcp.pop %v345
        %v347 = vmul.f32 %v345, %v346
        %v348 = vsub.f32 1.0, %v347
        %v349 = vmul.f32 %v346, %v348
        %v350 = vadd.f32 %v346, %v349
        %vm351 = vweird.f32 %v345
        %vm352 = vweird.f32 %v346
        %vm353 = vmor %vm351, %vm352
        %v354 = vsel %vm353, %v346, %v350
        %v355 = vand.u32 2147483647, %v345
        %vm356 = vcmp.eq.f32.partialorder %v355, 8.507059e+37
        %v357 = vand.u32 %v345, 2147483648
        %v358 = vor.u32 1.1754944e-38, %v357
        %v359 = vsel %vm356, %v358, %v354
        %v360 = vmul.f32 1.0, %v359
        %v361 = vperm.slane %v360, 0
        %v362 = vlaneseq
        %v363 = vshrl.u32 %v362, 7
        %365 = vset.pattern.permute.xlu0 %v363
        %366 = vperm.xlu0 %365, %v361
        %v367 = vpop.permute.xlu0 %366
        %v368 = vlaneseq
        %v369 = vshrl.u32 %v368, 7
        %v370 = vadd.s32 %v369, 8
        %371 = vset.pattern.permute.xlu0 %v370
        %372 = vperm.xlu0 %371, %v361
        %v373 = vpop.permute.xlu0 %372
        %v374 = vlaneseq
        %v375 = vshrl.u32 %v374, 7
        %v376 = vadd.s32 %v375, 16
        %377 = vset.pattern.permute.xlu0 %v376
        %378 = vperm.xlu0 %377, %v361
        %v379 = vpop.permute.xlu0 %378
        %v380 = vlaneseq
        %v381 = vshrl.u32 %v380, 7
        %v382 = vadd.s32 %v381, 24
        %383 = vset.pattern.permute.xlu0 %v382
        %384 = vperm.xlu0 %383, %v361
        %v385 = vpop.permute.xlu0 %384
        %v386 = vmul.f32 %v240, %v367
        %v387 = vmul.f32 %v241, %v373
        %v388 = vmul.f32 %v242, %v379
        %v389 = vmul.f32 %v243, %v385
        %390 = vst.msk [vmem:[%s234] sm:$0xff] %vm248, %v386
        %391 = vst.msk [vmem:[%s234 + $0x8] sm:$0xff] %vm248, %v387
        %392 = vst.msk [vmem:[%s234 + $0x10] sm:$0xff] %vm248, %v388
        %393 = vst.msk [vmem:[%s234 + $0x18] sm:$0xff] %vm248, %v389
        %s394 = sand.u32 %s119, 1
        %s395 = scalar_lea.sflag [#allocation4], %s394
        %s396 = sand.u32 %s119, 1
        %s397 = smul.addr %s396, 32
        %s398 = scalar_lea.vmem [#allocation7], %s397
        // Predicated region
        $region45: #{tpu_custom_call.1} parent=35 // pred_check
          %p399 = pneg %p129
        $region46: #{tpu_custom_call.1} parent=35 // pred_check_branch
          %401 = sbr.rel (%p399) target = $region48
        $region47: #{tpu_custom_call.1} parent=35 // pred_region
          %403 = vsyncadd %s395, 0
          %s404 = smul.addr %s22, 4
          %s405 = smul.addr %s404, 8
          %s406 = scalar_lea.hbm %s4, %s405
          %s407 = sshll.u32 %s398, 4
          %s408 = int_to_ptr.vmem [resolvable:$true] %s407
          %s409 = sshll.u32 %s406, 4
          %s410 = int_to_ptr.hbm [resolvable:$true] %s409
          %415 = dma.vmem_to_hbm [thread:$0]  %s408, 512, %s410, %s395, 128, 128, 8
        $region48: #{tpu_custom_call.1} parent=35 // pred_fallthru
          _
      $region36: #{tpu_custom_call.1} parent=5 // pred_fallthru
        _
      %p416 = scmp.le.s32.totalorder 2, %s17
      // Predicated region
      $region49: #{tpu_custom_call.1} parent=5 // pred_check
        %p417 = pneg %p416
      $region50: #{tpu_custom_call.1} parent=5 // pred_check_branch
        %419 = sbr.rel (%p417) target = $region52
      $region51: #{tpu_custom_call.1} parent=5 // pred_region
        %s420 = ssub.s32 %s17, 2
        // Predicated region
        $region53: #{tpu_custom_call.1} parent=51 // pred_check
          %p421 = pneg %p135
        $region54: #{tpu_custom_call.1} parent=51 // pred_check_branch
          %423 = sbr.rel (%p421) target = $region56
        $region55: #{tpu_custom_call.1} parent=51 // pred_region
          %s424 = sand.u32 %s120, 1
          %s425 = scalar_lea.sflag [#allocation4], %s424
          %s426 = sand.u32 %s120, 1
          %s427 = smul.addr %s426, 32
          %s428 = scalar_lea.vmem [#allocation7], %s427
          %430 = dma.done %s425, 512
        $region56: #{tpu_custom_call.1} parent=51 // pred_fallthru
          _
      $region52: #{tpu_custom_call.1} parent=5 // pred_fallthru
        _
    $region6: #{tpu_custom_call.1} parent=1 // loop_footer
      %s21 = sadd.s32 1, %s17
    $region7: #{tpu_custom_call.1} parent=1 // loop_footer_branch
      %16 = sbr.rel target = $region3
    $region8: #{tpu_custom_call.1} parent=1 // loop_exit
      _
    %431 = vsyncpa [#allocation3], 1
    %s432 = scalar_lea.sflag [#allocation3], 1
    %433 = vsyncpa %s432, 1
    %434 = vsyncpa [#allocation6], 1
    %435 = vsyncpa [#allocation4], 1
    %s436 = scalar_lea.sflag [#allocation4], 1
    %437 = vsyncpa %s436, 1

</llo_original>
